<compile_context>
chip_gen: v7x
topology: tpu7x:2x2x1
jax: 0.10.0
libtpu: 0.0.40
codegen_flags: <defaults>
</compile_context>

<pallas_src>
import math

import jax
import jax.numpy as jnp
from jax.experimental import pallas as pl
from jax.experimental.pallas import tpu as pltpu


def _cdiv(a, b):
    return -(-a // b)


def _round_up(a, m):
    return _cdiv(a, m) * m


def proj_kernel(a_ref, b_ref, wa_ref, wb_ref, bias_ref, out_ref):
    # bf16 operands go straight to the native bf16 MXU path; f32 accumulation.
    # Bias add + final cast stay in f32 on the accumulator (right choice on v5e too).
    out = (
        jnp.dot(b_ref[...], wb_ref[...], preferred_element_type=jnp.float32)
        + jnp.dot(a_ref[...], wa_ref[...], preferred_element_type=jnp.float32)
        + bias_ref[...]
    )
    out_ref[...] = out.astype(out_ref.dtype)


def _pick_tile(bsz, d_in, output_dim, feat_bytes, out_bytes):
    """Pick a batch tile from the chip's VMEM budget; return (tile_b, vmem_limit)."""
    try:
        info = pltpu.get_tpu_info()
        vmem_cap = int(getattr(info, "vmem_capacity_bytes", 0)) or (64 << 20)
    except Exception:  # not on TPU / API unavailable -> v7x-safe fallback
        vmem_cap = 64 << 20
    budget = int(vmem_cap * 0.7)  # leave headroom for compiler scratch

    def working_set(tb):
        feats = 2 * 2 * tb * d_in * feat_bytes        # 2 feat inputs, double-buffered
        wts = 2 * 2 * d_in * output_dim * feat_bytes  # 2 folded weights (default 2 bufs)
        bias = 2 * output_dim * 4                     # f32 bias
        outs = 2 * tb * output_dim * out_bytes        # output tile, double-buffered
        return feats + wts + bias + outs

    # Sub-32-bit dtypes pack along sublanes -> keep bf16 tiles multiples of 16 rows.
    base = 16 if feat_bytes < 4 else 8

    if bsz < 2 * base:
        # Single full block (block_shape == full array dim is always legal).
        tb = bsz
    else:
        # Largest power-of-two tile (in `base` units) that fits the VMEM budget.
        limit = _round_up(min(bsz, 1 << 16), base)
        tb_cap = base
        while tb_cap < limit and working_set(min(2 * tb_cap, limit)) <= budget:
            tb_cap = min(2 * tb_cap, limit)
        # Force >= 2 grid steps so the 'parallel' axis shards across v7x's two TCs.
        n_steps = max(2, _cdiv(bsz, tb_cap))
        tb = _round_up(_cdiv(bsz, n_steps), base)
        tb = max(base, min(tb, tb_cap))

    vmem_limit = int(min(vmem_cap, max(2 * working_set(tb) + (2 << 20), 32 << 20)))
    return tb, vmem_limit


def proj_forward(feat_A, feat_B, params, *, embed_dim, compute_dtype=jnp.bfloat16):
    # Softmax-collapse folding is only exact for single-token (length-1 key axis) feats.
    assert feat_A.ndim == 2 and feat_B.ndim == 2 and feat_A.shape == feat_B.shape, (
        "Proj kernel requires single-token features of shape (batch, input_dim)")
    bsz, d_in = feat_A.shape
    output_dim = params["wfc"].shape[1]
    out_dtype = feat_A.dtype

    # --- Host-side weight folding in f32; cast the folded result once ---------
    wfc_top = params["wfc"][:embed_dim]            # multiplies a2b  (from feat_B)
    wfc_bot = params["wfc"][embed_dim:]            # multiplies b2a  (from feat_A)
    w_for_B = (params["wv1"] @ wfc_top).astype(compute_dtype)      # (d_in, out)
    w_for_A = (params["wv2"] @ wfc_bot).astype(compute_dtype)      # (d_in, out)
    bias = (params["bv1"] @ wfc_top + params["bv2"] @ wfc_bot
            + params["bfc"]).astype(jnp.float32)                   # (1, out), f32

    # Stream the feature matrices as bf16 (the kernel is HBM-read bound).
    fa = feat_A.astype(compute_dtype)
    fb = feat_B.astype(compute_dtype)

    feat_bytes = jnp.dtype(compute_dtype).itemsize
    out_bytes = jnp.dtype(out_dtype).itemsize

    tb, vmem_limit = _pick_tile(bsz, d_in, output_dim, feat_bytes, out_bytes)
    grid = (pl.cdiv(bsz, tb),)

    cost = pl.CostEstimate(
        flops=4 * bsz * d_in * output_dim,
        transcendentals=0,
        bytes_accessed=(2 * bsz * d_in * feat_bytes
                        + bsz * output_dim * out_bytes
                        + 2 * d_in * output_dim * feat_bytes
                        + output_dim * 4),
    )

    feat_spec = pl.BlockSpec((tb, d_in), lambda i: (i, 0))
    # Weights/bias use a constant index_map -> fetched once, resident across the grid.
    # (Their default 2-deep pipeline buffers are accounted for in the VMEM budget.)
    w_spec = pl.BlockSpec((d_in, output_dim), lambda i: (0, 0))
    bias_spec = pl.BlockSpec((1, output_dim), lambda i: (0, 0))
    out_spec = pl.BlockSpec((tb, output_dim), lambda i: (i, 0))

    return pl.pallas_call(
        proj_kernel,
        out_shape=jax.ShapeDtypeStruct((bsz, output_dim), out_dtype),
        grid=grid,
        in_specs=[feat_spec, feat_spec, w_spec, w_spec, bias_spec],
        out_specs=out_spec,
        compiler_params=pltpu.CompilerParams(
            dimension_semantics=("parallel",),
            vmem_limit_bytes=vmem_limit,
        ),
        cost_estimate=cost,
    )(fa, fb, w_for_A, w_for_B, bias)


def bf16_operand_reference(feat_A, feat_B, params, *, embed_dim,
                           compute_dtype=jnp.bfloat16):
    """Same math as the kernel (bf16-rounded operands, f32 accumulation)."""
    wfc_top = params["wfc"][:embed_dim]
    wfc_bot = params["wfc"][embed_dim:]
    w_for_B = (params["wv1"] @ wfc_top).astype(compute_dtype).astype(jnp.float32)
    w_for_A = (params["wv2"] @ wfc_bot).astype(compute_dtype).astype(jnp.float32)
    bias = params["bv1"] @ wfc_top + params["bv2"] @ wfc_bot + params["bfc"]
    fa = feat_A.astype(compute_dtype).astype(jnp.float32)
    fb = feat_B.astype(compute_dtype).astype(jnp.float32)
    hi = jax.lax.Precision.HIGHEST
    out = (jnp.dot(fb, w_for_B, precision=hi)
           + jnp.dot(fa, w_for_A, precision=hi) + bias)
    return out.astype(feat_A.dtype)


def reference_forward(feat_A, feat_B, params, *, embed_dim):
    """Full original computation (Q/K/softmax kept) to verify semantics."""
    scale = 1.0 / math.sqrt(embed_dim)

    def ca(X, Y, wq, bq, wk, bk, wv, bv):
        Q = X @ wq + bq
        K = Y @ wk + bk
        V = Y @ wv + bv
        s = jnp.sum(Q * K, axis=-1, keepdims=True) * scale
        attn = jax.nn.softmax(s, axis=-1)  # length-1 key axis -> ones
        return attn * V

    a2b = ca(feat_A, feat_B, params["wq1"], params["bq1"], params["wk1"],
             params["bk1"], params["wv1"], params["bv1"])
    b2a = ca(feat_B, feat_A, params["wq2"], params["bq2"], params["wk2"],
             params["bk2"], params["wv2"], params["bv2"])
    x = jnp.concatenate([a2b, b2a], axis=1)
    return x @ params["wfc"] + params["bfc"]


def init_params(key, input_dim, embed_dim, output_dim):
    ks = jax.random.split(key, 8)

    def lin(k, fan_in, fan_out):
        kw, kb = jax.random.split(k)
        bound = 1.0 / math.sqrt(fan_in)
        w = jax.random.uniform(kw, (fan_in, fan_out), jnp.float32, -bound, bound)
        b = jax.random.uniform(kb, (1, fan_out), jnp.float32, -bound, bound)
        return w, b

    wq1, bq1 = lin(ks[0], input_dim, embed_dim)
    wk1, bk1 = lin(ks[1], input_dim, embed_dim)
    wv1, bv1 = lin(ks[2], input_dim, embed_dim)
    wq2, bq2 = lin(ks[3], input_dim, embed_dim)
    wk2, bk2 = lin(ks[4], input_dim, embed_dim)
    wv2, bv2 = lin(ks[5], input_dim, embed_dim)
    wfc, bfc = lin(ks[6], embed_dim * 2, output_dim)
    return dict(wq1=wq1, bq1=bq1, wk1=wk1, bk1=bk1, wv1=wv1, bv1=bv1,
                wq2=wq2, bq2=bq2, wk2=wk2, bk2=bk2, wv2=wv2, bv2=bv2,
                wfc=wfc, bfc=bfc)


if __name__ == "__main__":
    batch, input_dim, embed_dim, output_dim = 8, 32, 32, 4

    key = jax.random.PRNGKey(0)
    k_a, k_b, k_p = jax.random.split(key, 3)
    feat_A = jax.random.normal(k_a, (batch, input_dim), jnp.float32)
    feat_B = jax.random.normal(k_b, (batch, input_dim), jnp.float32)
    params = init_params(k_p, input_dim, embed_dim, output_dim)

    out = proj_forward(feat_A, feat_B, params, embed_dim=embed_dim)
    out = jax.block_until_ready(out)
    assert out.shape == (batch, output_dim)

    # Tight check: kernel vs. identical bf16-rounded-operand math (verifies the kernel).
    kref = bf16_operand_reference(feat_A, feat_B, params, embed_dim=embed_dim)
    assert jnp.allclose(out, kref, atol=1e-5, rtol=1e-5)

    # Semantic check: vs. the full f32 Q/K/softmax reference (bf16-streaming tolerance).
    ref = reference_forward(feat_A, feat_B, params, embed_dim=embed_dim)
    assert jnp.allclose(out, ref, atol=5e-2, rtol=2e-2)

    print("KERNEL_OK")
</pallas_src>

<mosaic_0001>
module attributes {stable_mosaic.version = 11 : i64} {
  func.func @proj_kernel(%arg0: i32, %arg1: memref<8x32xbf16, #tpu.memory_space<vmem>>, %arg2: memref<8x32xbf16, #tpu.memory_space<vmem>>, %arg3: memref<32x4xbf16, #tpu.memory_space<vmem>>, %arg4: memref<32x4xbf16, #tpu.memory_space<vmem>>, %arg5: memref<1x4xf32, #tpu.memory_space<vmem>>, %arg6: memref<8x4xf32, #tpu.memory_space<vmem>>) attributes {dimension_semantics = [#tpu.dimension_semantics<parallel>], iteration_bounds = array<i64: 1>, scalar_prefetch = 0 : i64, scratch_operands = 0 : i64, tpu.core_type = #tpu.core_type<tc>, window_params = [{transform_indices = @transform_0, window_bounds = array<i64: 8, 32>}, {transform_indices = @transform_1, window_bounds = array<i64: 8, 32>}, {pipeline_mode = #tpu.pipeline_mode<synchronous>, transform_indices = @transform_2, window_bounds = array<i64: 32, 4>}, {pipeline_mode = #tpu.pipeline_mode<synchronous>, transform_indices = @transform_3, window_bounds = array<i64: 32, 4>}, {pipeline_mode = #tpu.pipeline_mode<synchronous>, transform_indices = @transform_4, window_bounds = array<i64: 1, 4>}, {transform_indices = @transform_5, window_bounds = array<i64: 8, 4>}]} {
    %c0 = arith.constant 0 : index
    %c0_0 = arith.constant 0 : index
    %0 = vector.load %arg2[%c0, %c0_0] : memref<8x32xbf16, #tpu.memory_space<vmem>>, vector<8x32xbf16>
    %c0_1 = arith.constant 0 : index
    %c0_2 = arith.constant 0 : index
    %1 = vector.load %arg4[%c0_1, %c0_2] : memref<32x4xbf16, #tpu.memory_space<vmem>>, vector<32x4xbf16>
    %cst = arith.constant dense<0.000000e+00> : vector<8x4xf32>
    %2 = tpu.matmul %0, %1, %cst {dimension_numbers = #tpu.dot_dimension_numbers<[1], [0], [0], [1], [0, 0, 1, 1], [], []>} : vector<8x32xbf16>, vector<32x4xbf16>, vector<8x4xf32> -> vector<8x4xf32>
    %c0_3 = arith.constant 0 : index
    %c0_4 = arith.constant 0 : index
    %3 = vector.load %arg1[%c0_3, %c0_4] : memref<8x32xbf16, #tpu.memory_space<vmem>>, vector<8x32xbf16>
    %c0_5 = arith.constant 0 : index
    %c0_6 = arith.constant 0 : index
    %4 = vector.load %arg3[%c0_5, %c0_6] : memref<32x4xbf16, #tpu.memory_space<vmem>>, vector<32x4xbf16>
    %cst_7 = arith.constant dense<0.000000e+00> : vector<8x4xf32>
    %5 = tpu.matmul %3, %4, %cst_7 {dimension_numbers = #tpu.dot_dimension_numbers<[1], [0], [0], [1], [0, 0, 1, 1], [], []>} : vector<8x32xbf16>, vector<32x4xbf16>, vector<8x4xf32> -> vector<8x4xf32>
    %6 = arith.addf %2, %5 : vector<8x4xf32>
    %c0_8 = arith.constant 0 : index
    %c0_9 = arith.constant 0 : index
    %7 = vector.load %arg5[%c0_8, %c0_9] : memref<1x4xf32, #tpu.memory_space<vmem>>, vector<1x4xf32>
    %8 = vector.broadcast %7 : vector<1x4xf32> to vector<8x4xf32>
    %9 = arith.addf %6, %8 : vector<8x4xf32>
    %c0_10 = arith.constant 0 : index
    %c0_11 = arith.constant 0 : index
    %10 = vector.load %arg6[%c0_10, %c0_11] : memref<8x4xf32, #tpu.memory_space<vmem>>, vector<8x4xf32>
    tpu.vector_store %arg6[%c0_10, %c0_11], %9 {strides = array<i32>} : memref<8x4xf32, #tpu.memory_space<vmem>>, vector<8x4xf32>,
    return
  }
  func.func @transform_0(%arg0: i32) -> (i32, i32) {
    %c0_i32 = arith.constant 0 : i32
    %c0_i32_0 = arith.constant 0 : i32
    return %arg0, %c0_i32 : i32, i32
  }
  func.func @transform_1(%arg0: i32) -> (i32, i32) {
    %c0_i32 = arith.constant 0 : i32
    %c0_i32_0 = arith.constant 0 : i32
    return %arg0, %c0_i32 : i32, i32
  }
  func.func @transform_2(%arg0: i32) -> (i32, i32) {
    %c0_i32 = arith.constant 0 : i32
    %c0_i32_0 = arith.constant 0 : i32
    %c0_i32_1 = arith.constant 0 : i32
    return %c0_i32, %c0_i32_0 : i32, i32
  }
  func.func @transform_3(%arg0: i32) -> (i32, i32) {
    %c0_i32 = arith.constant 0 : i32
    %c0_i32_0 = arith.constant 0 : i32
    %c0_i32_1 = arith.constant 0 : i32
    return %c0_i32, %c0_i32_0 : i32, i32
  }
  func.func @transform_4(%arg0: i32) -> (i32, i32) {
    %c0_i32 = arith.constant 0 : i32
    %c0_i32_0 = arith.constant 0 : i32
    %c0_i32_1 = arith.constant 0 : i32
    return %c0_i32, %c0_i32_0 : i32, i32
  }
  func.func @transform_5(%arg0: i32) -> (i32, i32) {
    %c0_i32 = arith.constant 0 : i32
    %c0_i32_0 = arith.constant 0 : i32
    return %arg0, %c0_i32 : i32, i32
  }
}

</mosaic_0001>

<llo_original>
// kernel: tpu_custom_call.1
$region0: #{tpu_custom_call.1}
  #allocation0 [shape = 'u32[]', space=smem, size = 0x4, offset = 0x4, fixed_abs, tag = 'smem constant byte address 0x4 - core index']
  #allocation1 [shape = 'u32[144,128]{1,0:T(1,128)}', space=vmem, size = 0x12000, scoped, tag = 'internal scratch']
  %s0 = inlined_call_operand.vmem [shape: bf16[8,32], index: 0, kind: input, shape index: {}]
  %s1 = inlined_call_operand.vmem [shape: bf16[8,32], index: 1, kind: input, shape index: {}]
  %s2 = inlined_call_operand.vmem [shape: bf16[32,4], index: 2, kind: input, shape index: {}]
  %s3 = inlined_call_operand.vmem [shape: bf16[32,4], index: 3, kind: input, shape index: {}]
  %s4 = inlined_call_operand.vmem [shape: f32[1,4], index: 4, kind: input, shape index: {}]
  %s5 = inlined_call_operand.vmem [shape: f32[8,4], index: 5, kind: output, shape index: {}]
  %s6 = sld [smem:[#allocation0]]
  $region30: #{tpu_custom_call.1} parent=0
    _
  %s8 = ssub.s32 1, %s6
  %s9 = scalar_select 0, %s8, %s6
  // Predicated region
  $region2: #{tpu_custom_call.1} parent=0 // pred_check
    _
  $region3: #{tpu_custom_call.1} parent=0 // pred_check_branch
    %11 = sbr.rel (0) target = $region5
  $region4: #{tpu_custom_call.1} parent=0 // pred_region
    _
  $region5: #{tpu_custom_call.1} parent=0 // pred_fallthru
    _
  // Predicated region
  $region6: #{tpu_custom_call.1} parent=0 // pred_check
    _
  $region7: #{tpu_custom_call.1} parent=0 // pred_check_branch
    %13 = sbr.rel (0) target = $region9
  $region8: #{tpu_custom_call.1} parent=0 // pred_region
    _
  $region9: #{tpu_custom_call.1} parent=0 // pred_fallthru
    _
  // Predicated region
  $region10: #{tpu_custom_call.1} parent=0 // pred_check
    _
  $region11: #{tpu_custom_call.1} parent=0 // pred_check_branch
    %15 = sbr.rel (0) target = $region13
  $region12: #{tpu_custom_call.1} parent=0 // pred_region
    _
  $region13: #{tpu_custom_call.1} parent=0 // pred_fallthru
    _
  // Predicated region
  $region14: #{tpu_custom_call.1} parent=0 // pred_check
    _
  $region15: #{tpu_custom_call.1} parent=0 // pred_check_branch
    %17 = sbr.rel (0) target = $region17
  $region16: #{tpu_custom_call.1} parent=0 // pred_region
    _
  $region17: #{tpu_custom_call.1} parent=0 // pred_fallthru
    _
  // Predicated region
  $region18: #{tpu_custom_call.1} parent=0 // pred_check
    _
  $region19: #{tpu_custom_call.1} parent=0 // pred_check_branch
    %19 = sbr.rel (0) target = $region21
  $region20: #{tpu_custom_call.1} parent=0 // pred_region
    _
  $region21: #{tpu_custom_call.1} parent=0 // pred_fallthru
    _
  %v21 = vld [vmem:[%s1] sm:$0xf]
  %v22 = vld [vmem:[%s3] sm:$0xf]
  %v23 = vld [vmem:[%s3 + $0x4] sm:$0xf]
  %v24 = vld [vmem:[%s3 + $0x8] sm:$0xf]
  %v25 = vld [vmem:[%s3 + $0xc] sm:$0xf]
  %v26 = vld [vmem:[%s0] sm:$0xf]
  %v27 = vld [vmem:[%s2] sm:$0xf]
  %v28 = vld [vmem:[%s2 + $0x4] sm:$0xf]
  %v29 = vld [vmem:[%s2 + $0x8] sm:$0xf]
  %v30 = vld [vmem:[%s2 + $0xc] sm:$0xf]
  %v35 = vunpack.c.l.b16 %v27
  %v36 = vunpack.c.l.b16 %v28
  %v37 = vunpack.c.l.b16 %v29
  %v38 = vunpack.c.l.b16 %v30
  %v39 = vpack.c.b16 %v36, %v35
  %v40 = vpack.c.b16 %v38, %v37
  %vm43 = vcmask 261120
  %v45 = vsel %vm43, %v26, 0
  %47 = vmatprep.subr.bf16.mxu0 0
  %48 = vmatpush1.bf16.msra.mxu0 %v39
  %49 = vmatprep.subr.bf16.mxu0 0
  %50 = vmatpush1.bf16.msra.mxu0 %v40
  %51 = vmatprep.subr.bf16.mxu0 0
  %52 = vmatpush1.bf16.msra.mxu0 0
  %53 = vmatprep.subr.bf16.mxu0 0
  %54 = vmatpush1.bf16.msra.mxu0 0
  %55 = vmatprep.subr.bf16.mxu0 0
  %56 = vmatpush1.bf16.msra.mxu0 0
  %57 = vmatprep.subr.bf16.mxu0 0
  %58 = vmatpush1.bf16.msra.mxu0 0
  %59 = vmatprep.subr.bf16.mxu0 0
  %60 = vmatpush1.bf16.msra.mxu0 0
  %61 = vmatprep.subr.bf16.mxu0 0
  %62 = vmatpush1.bf16.msra.mxu0 0
  %63 = vmatprep.subr.bf16.mxu0 0
  %64 = vmatpush1.bf16.msra.mxu0 0
  %65 = vmatprep.subr.bf16.mxu0 0
  %66 = vmatpush1.bf16.msra.mxu0 0
  %67 = vmatprep.subr.bf16.mxu0 0
  %68 = vmatpush1.bf16.msra.mxu0 0
  %69 = vmatprep.subr.bf16.mxu0 0
  %70 = vmatpush1.bf16.msra.mxu0 0
  %71 = vmatprep.subr.bf16.mxu0 0
  %72 = vmatpush1.bf16.msra.mxu0 0
  %73 = vmatprep.subr.bf16.mxu0 0
  %74 = vmatpush1.bf16.msra.mxu0 0
  %75 = vmatprep.subr.bf16.mxu0 0
  %76 = vmatpush1.bf16.msra.mxu0 0
  %77 = vmatprep.subr.bf16.mxu0 0
  %78 = vmatpush1.bf16.msra.mxu0 0
  %79 = vmatprep.mubr.bf16.mxu0 0
  %80 = vmatmul.mubr.bf16.gmra.mrb[0].mxu0 %v45
  %v81 = vpop.f32.mrb[0].mxu0
  %v82 = vadd.f32 0.0, %v81
  %v83 = vpop.f32.mrb[0].mxu0
  %v84 = vpop.f32.mrb[0].mxu0
  %v85 = vpop.f32.mrb[0].mxu0
  %86 = vdwg.mxu0
  %v91 = vunpack.c.l.b16 %v22
  %v92 = vunpack.c.l.b16 %v23
  %v93 = vunpack.c.l.b16 %v24
  %v94 = vunpack.c.l.b16 %v25
  %v95 = vpack.c.b16 %v92, %v91
  %v96 = vpack.c.b16 %v94, %v93
  %v100 = vsel %vm43, %v21, 0
  %102 = vmatprep.subr.bf16.mxu0 0
  %103 = vmatpush1.bf16.msra.mxu0 %v95
  %104 = vmatprep.subr.bf16.mxu0 0
  %105 = vmatpush1.bf16.msra.mxu0 %v96
  %106 = vmatprep.subr.bf16.mxu0 0
  %107 = vmatpush1.bf16.msra.mxu0 0
  %108 = vmatprep.subr.bf16.mxu0 0
  %109 = vmatpush1.bf16.msra.mxu0 0
  %110 = vmatprep.subr.bf16.mxu0 0
  %111 = vmatpush1.bf16.msra.mxu0 0
  %112 = vmatprep.subr.bf16.mxu0 0
  %113 = vmatpush1.bf16.msra.mxu0 0
  %114 = vmatprep.subr.bf16.mxu0 0
  %115 = vmatpush1.bf16.msra.mxu0 0
  %116 = vmatprep.subr.bf16.mxu0 0
  %117 = vmatpush1.bf16.msra.mxu0 0
  %118 = vmatprep.subr.bf16.mxu0 0
  %119 = vmatpush1.bf16.msra.mxu0 0
  %120 = vmatprep.subr.bf16.mxu0 0
  %121 = vmatpush1.bf16.msra.mxu0 0
  %122 = vmatprep.subr.bf16.mxu0 0
  %123 = vmatpush1.bf16.msra.mxu0 0
  %124 = vmatprep.subr.bf16.mxu0 0
  %125 = vmatpush1.bf16.msra.mxu0 0
  %126 = vmatprep.subr.bf16.mxu0 0
  %127 = vmatpush1.bf16.msra.mxu0 0
  %128 = vmatprep.subr.bf16.mxu0 0
  %129 = vmatpush1.bf16.msra.mxu0 0
  %130 = vmatprep.subr.bf16.mxu0 0
  %131 = vmatpush1.bf16.msra.mxu0 0
  %132 = vmatprep.subr.bf16.mxu0 0
  %133 = vmatpush1.bf16.msra.mxu0 0
  %134 = vmatprep.mubr.bf16.mxu0 0
  %135 = vmatmul.mubr.bf16.gmra.mrb[0].mxu0 %v100
  %v136 = vpop.f32.mrb[0].mxu0
  %v137 = vadd.f32 %v82, %v136
  %v138 = vpop.f32.mrb[0].mxu0
  %v139 = vpop.f32.mrb[0].mxu0
  %v140 = vpop.f32.mrb[0].mxu0
  %141 = vdwg.mxu0
  %v142 = vld [vmem:[%s4] sm:$0x1]
  %v144 = vlaneseq
  %v145 = vshrl.u32 %v144, 7
  %v146 = vsub.s32 0, %v145
  %v147 = vrot.slane %v142, %v146
  %v149 = vadd.f32 %v137, %v147
  %vm150 = vcmask 31744
  %151 = vst.msk [vmem:[%s5] sm:$0xff] %vm150, %v149
  // Predicated region
  $region22: #{tpu_custom_call.1} parent=0 // pred_check
    _
  $region23: #{tpu_custom_call.1} parent=0 // pred_check_branch
    %153 = sbr.rel (0) target = $region25
  $region24: #{tpu_custom_call.1} parent=0 // pred_region
    _
  $region25: #{tpu_custom_call.1} parent=0 // pred_fallthru
    _
  // Predicated region
  $region26: #{tpu_custom_call.1} parent=0 // pred_check
    _
  $region27: #{tpu_custom_call.1} parent=0 // pred_check_branch
    %155 = sbr.rel (0) target = $region29
  $region28: #{tpu_custom_call.1} parent=0 // pred_region
    _
  $region29: #{tpu_custom_call.1} parent=0 // pred_fallthru
    _

</llo_original>
